<compile_context>
chip_gen: v6e
topology: v6e:2x2x1
jax: 0.10.0
libtpu: 0.0.40
codegen_flags: <defaults>
</compile_context>

<pallas_src>
import functools

import jax
import jax.numpy as jnp
from jax.experimental import pallas as pl
from jax.experimental.pallas import tpu as pltpu


_OUT_DIM = 8          # real number of classes (nn5 out_features)
_OUT_PAD = 128        # lane-dense padded output width
_NEG_BIG = -1e30      # bias padding -> padded logits contribute exp(.) == 0


def _round_up(x, m):
    return ((x + m - 1) // m) * m


def _mlp_kernel(x_ref,
                w1_ref, b1_ref,
                w2_ref, b2_ref,
                w3_ref, b3_ref,
                w4_ref, b4_ref,
                w5_ref, b5_ref,
                o_ref):
    bf16 = jnp.bfloat16

    # nn1 + relu  (bf16 inputs, f32 accumulation on the MXU)
    h = jnp.dot(x_ref[...], w1_ref[...], preferred_element_type=jnp.float32)
    h = jnp.maximum(h + b1_ref[...], 0.0)
    # nn2 + relu
    h = jnp.dot(h.astype(bf16), w2_ref[...], preferred_element_type=jnp.float32)
    h = jnp.maximum(h + b2_ref[...], 0.0)
    # nn3 + relu
    h = jnp.dot(h.astype(bf16), w3_ref[...], preferred_element_type=jnp.float32)
    h = jnp.maximum(h + b3_ref[...], 0.0)
    # nn4 + relu
    h = jnp.dot(h.astype(bf16), w4_ref[...], preferred_element_type=jnp.float32)
    h = jnp.maximum(h + b4_ref[...], 0.0)
    # nn5 (logits; padded columns get ~-1e30 from the bias padding)
    logits = jnp.dot(h.astype(bf16), w5_ref[...],
                     preferred_element_type=jnp.float32) + b5_ref[...]

    # log_softmax over dim=1 (last axis).  Padded columns are ~-1e30, so the
    # max is the real max and exp(padded - max) underflows to exactly 0.
    m = jnp.max(logits, axis=-1, keepdims=True)
    shifted = logits - m
    lse = jnp.log(jnp.sum(jnp.exp(shifted), axis=-1, keepdims=True))
    o_ref[...] = shifted - lse


def _choose_block_m(batch, block_m):
    """Pick an effective batch tile: multiple of 8, <= block_m, and (when the
    batch allows) small enough that the grid has >= 2 parallel steps so v7x
    can shard across its 2 TensorCores."""
    bm = min(block_m, _round_up(batch, 8))
    bm = max(8, _round_up(bm, 8))
    if batch >= 16 and pl.cdiv(batch, bm) < 2:
        bm = _round_up(pl.cdiv(batch, 2), 8)
    return bm


@functools.partial(jax.jit, static_argnames=("block_m",))
def model_bow_forward(x, params, block_m=512):
    """x: [B, features] float. params: dict of (w_i [in, out], b_i [1, out]).

    Returns [B, 8] float32 log-probabilities.  block_m is the batch tile
    (sweep 256-1024 for large batches); the batch is padded internally so any
    B works.  For peak HBM efficiency feed x already in bfloat16.
    """
    B, F = x.shape
    bm = _choose_block_m(B, block_m)
    grid_m = pl.cdiv(B, bm)
    B_pad = grid_m * bm

    # bf16 activations/weights (f32 MXU accumulation); f32 biases.
    xb = x.astype(jnp.bfloat16)
    if B_pad != B:
        xb = jnp.pad(xb, ((0, B_pad - B), (0, 0)))

    w1, w2, w3, w4 = (params[f"w{i}"].astype(jnp.bfloat16) for i in range(1, 5))
    b1, b2, b3, b4 = (params[f"b{i}"].astype(jnp.float32) for i in range(1, 5))

    # Pad nn5's output dim 8 -> 128 (zero weights, -1e30 bias) so the output
    # store is lane-dense and the last matmul N is MXU-friendly.
    w5 = jnp.zeros((params["w5"].shape[0], _OUT_PAD), jnp.bfloat16)
    w5 = w5.at[:, :_OUT_DIM].set(params["w5"].astype(jnp.bfloat16))
    b5 = jnp.full((1, _OUT_PAD), _NEG_BIG, jnp.float32)
    b5 = b5.at[:, :_OUT_DIM].set(params["b5"].astype(jnp.float32))

    def full_spec(shape):
        # Whole (small) tensor resident every grid step; constant index map.
        return pl.BlockSpec(shape, lambda i: (0, 0))

    out = pl.pallas_call(
        _mlp_kernel,
        out_shape=jax.ShapeDtypeStruct((B_pad, _OUT_PAD), jnp.float32),
        grid_spec=pltpu.PrefetchScalarGridSpec(
            num_scalar_prefetch=0,
            grid=(grid_m,),
            in_specs=[
                pl.BlockSpec((bm, F), lambda i: (i, 0)),
                full_spec(w1.shape), full_spec(b1.shape),
                full_spec(w2.shape), full_spec(b2.shape),
                full_spec(w3.shape), full_spec(b3.shape),
                full_spec(w4.shape), full_spec(b4.shape),
                full_spec(w5.shape), full_spec(b5.shape),
            ],
            out_specs=pl.BlockSpec((bm, _OUT_PAD), lambda i: (i, 0)),
        ),
        compiler_params=pltpu.CompilerParams(
            dimension_semantics=("parallel",),
            # Explicit VMEM budget: even block_m=1024 uses only a few MiB
            # (x tile + h1 intermediate + ~100 KiB of weights, double-buffered),
            # comfortably inside v7x's 64 MiB physical VMEM.
            vmem_limit_bytes=32 * 1024 * 1024,
        ),
    )(xb, w1, b1, w2, b2, w3, b3, w4, b4, w5, b5)

    return out[:B, :_OUT_DIM]


def init_params(key, features):
    """Deterministic synthetic init (PyTorch-like uniform). Weights [in, out]."""
    dims = [features, 256, 64, 32, 16, 8]
    params = {}
    for idx in range(5):
        key, kw, kb = jax.random.split(key, 3)
        fan_in, fan_out = dims[idx], dims[idx + 1]
        bound = 1.0 / jnp.sqrt(fan_in)
        params[f"w{idx + 1}"] = jax.random.uniform(
            kw, (fan_in, fan_out), jnp.float32, -bound, bound)
        params[f"b{idx + 1}"] = jax.random.uniform(
            kb, (1, fan_out), jnp.float32, -bound, bound)
    return params


def reference_forward(x, params):
    """Pure-JAX f32 reference of the PyTorch forward()."""
    h = x
    for i in range(1, 5):
        h = jnp.maximum(
            jnp.dot(h, params[f"w{i}"], precision="highest") + params[f"b{i}"],
            0.0)
    logits = jnp.dot(h, params["w5"], precision="highest") + params["b5"]
    return jax.nn.log_softmax(logits, axis=1)


if __name__ == "__main__":
    key = jax.random.PRNGKey(0)
    k_x, k_p = jax.random.split(key)

    batch, features = 8, 128
    x = jax.random.normal(k_x, (batch, features), jnp.float32)
    params = init_params(k_p, features)

    out = model_bow_forward(x, params)
    out = jax.block_until_ready(out)

    ref = reference_forward(x, params)
    assert out.shape == (batch, _OUT_DIM)
    assert bool(jnp.all(jnp.isfinite(out)))
    # bf16 activations/weights => compare against the f32 reference loosely.
    assert jnp.allclose(out, ref, atol=5e-2, rtol=5e-2), float(
        jnp.max(jnp.abs(out - ref)))

    # Exercise batch padding + a multi-step grid (v7x 2-core path).
    x2 = jax.random.normal(k_x, (300, features), jnp.float32)
    out2 = jax.block_until_ready(model_bow_forward(x2, params, block_m=256))
    ref2 = reference_forward(x2, params)
    assert out2.shape == (300, _OUT_DIM)
    assert bool(jnp.all(jnp.isfinite(out2)))
    assert jnp.allclose(out2, ref2, atol=5e-2, rtol=5e-2), float(
        jnp.max(jnp.abs(out2 - ref2)))

    print("KERNEL_OK")
</pallas_src>

<mosaic_0001>
module attributes {stable_mosaic.version = 11 : i64} {
  func.func @_mlp_kernel(%arg0: i32, %arg1: memref<8x128xbf16, #tpu.memory_space<vmem>>, %arg2: memref<128x256xbf16, #tpu.memory_space<vmem>>, %arg3: memref<1x256xf32, #tpu.memory_space<vmem>>, %arg4: memref<256x64xbf16, #tpu.memory_space<vmem>>, %arg5: memref<1x64xf32, #tpu.memory_space<vmem>>, %arg6: memref<64x32xbf16, #tpu.memory_space<vmem>>, %arg7: memref<1x32xf32, #tpu.memory_space<vmem>>, %arg8: memref<32x16xbf16, #tpu.memory_space<vmem>>, %arg9: memref<1x16xf32, #tpu.memory_space<vmem>>, %arg10: memref<16x128xbf16, #tpu.memory_space<vmem>>, %arg11: memref<1x128xf32, #tpu.memory_space<vmem>>, %arg12: memref<8x128xf32, #tpu.memory_space<vmem>>) attributes {dimension_semantics = [#tpu.dimension_semantics<parallel>], iteration_bounds = array<i64: 1>, scalar_prefetch = 0 : i64, scratch_operands = 0 : i64, tpu.core_type = #tpu.core_type<tc>, window_params = [{transform_indices = @transform_0, window_bounds = array<i64: 8, 128>}, {pipeline_mode = #tpu.pipeline_mode<synchronous>, transform_indices = @transform_1, window_bounds = array<i64: 128, 256>}, {pipeline_mode = #tpu.pipeline_mode<synchronous>, transform_indices = @transform_2, window_bounds = array<i64: 1, 256>}, {pipeline_mode = #tpu.pipeline_mode<synchronous>, transform_indices = @transform_3, window_bounds = array<i64: 256, 64>}, {pipeline_mode = #tpu.pipeline_mode<synchronous>, transform_indices = @transform_4, window_bounds = array<i64: 1, 64>}, {pipeline_mode = #tpu.pipeline_mode<synchronous>, transform_indices = @transform_5, window_bounds = array<i64: 64, 32>}, {pipeline_mode = #tpu.pipeline_mode<synchronous>, transform_indices = @transform_6, window_bounds = array<i64: 1, 32>}, {pipeline_mode = #tpu.pipeline_mode<synchronous>, transform_indices = @transform_7, window_bounds = array<i64: 32, 16>}, {pipeline_mode = #tpu.pipeline_mode<synchronous>, transform_indices = @transform_8, window_bounds = array<i64: 1, 16>}, {pipeline_mode = #tpu.pipeline_mode<synchronous>, transform_indices = @transform_9, window_bounds = array<i64: 16, 128>}, {pipeline_mode = #tpu.pipeline_mode<synchronous>, transform_indices = @transform_10, window_bounds = array<i64: 1, 128>}, {transform_indices = @transform_11, window_bounds = array<i64: 8, 128>}]} {
    %c0 = arith.constant 0 : index
    %c0_0 = arith.constant 0 : index
    %0 = vector.load %arg1[%c0, %c0_0] : memref<8x128xbf16, #tpu.memory_space<vmem>>, vector<8x128xbf16>
    %c0_1 = arith.constant 0 : index
    %c0_2 = arith.constant 0 : index
    %1 = vector.load %arg2[%c0_1, %c0_2] : memref<128x256xbf16, #tpu.memory_space<vmem>>, vector<128x256xbf16>
    %cst = arith.constant dense<0.000000e+00> : vector<8x256xf32>
    %2 = tpu.matmul %0, %1, %cst {dimension_numbers = #tpu.dot_dimension_numbers<[1], [0], [0], [1], [0, 0, 1, 1], [], []>} : vector<8x128xbf16>, vector<128x256xbf16>, vector<8x256xf32> -> vector<8x256xf32>
    %c0_3 = arith.constant 0 : index
    %c0_4 = arith.constant 0 : index
    %3 = vector.load %arg3[%c0_3, %c0_4] : memref<1x256xf32, #tpu.memory_space<vmem>>, vector<1x256xf32>
    %4 = vector.broadcast %3 : vector<1x256xf32> to vector<8x256xf32>
    %5 = arith.addf %2, %4 : vector<8x256xf32>
    %cst_5 = arith.constant 0.000000e+00 : f32
    %6 = vector.broadcast %cst_5 : f32 to vector<8x256xf32>
    %7 = arith.maximumf %5, %6 : vector<8x256xf32>
    %8 = arith.truncf %7 : vector<8x256xf32> to vector<8x256xbf16>
    %c0_6 = arith.constant 0 : index
    %c0_7 = arith.constant 0 : index
    %9 = vector.load %arg4[%c0_6, %c0_7] : memref<256x64xbf16, #tpu.memory_space<vmem>>, vector<256x64xbf16>
    %cst_8 = arith.constant dense<0.000000e+00> : vector<8x64xf32>
    %10 = tpu.matmul %8, %9, %cst_8 {dimension_numbers = #tpu.dot_dimension_numbers<[1], [0], [0], [1], [0, 0, 1, 1], [], []>} : vector<8x256xbf16>, vector<256x64xbf16>, vector<8x64xf32> -> vector<8x64xf32>
    %c0_9 = arith.constant 0 : index
    %c0_10 = arith.constant 0 : index
    %11 = vector.load %arg5[%c0_9, %c0_10] : memref<1x64xf32, #tpu.memory_space<vmem>>, vector<1x64xf32>
    %12 = vector.broadcast %11 : vector<1x64xf32> to vector<8x64xf32>
    %13 = arith.addf %10, %12 : vector<8x64xf32>
    %cst_11 = arith.constant 0.000000e+00 : f32
    %14 = vector.broadcast %cst_11 : f32 to vector<8x64xf32>
    %15 = arith.maximumf %13, %14 : vector<8x64xf32>
    %16 = arith.truncf %15 : vector<8x64xf32> to vector<8x64xbf16>
    %c0_12 = arith.constant 0 : index
    %c0_13 = arith.constant 0 : index
    %17 = vector.load %arg6[%c0_12, %c0_13] : memref<64x32xbf16, #tpu.memory_space<vmem>>, vector<64x32xbf16>
    %cst_14 = arith.constant dense<0.000000e+00> : vector<8x32xf32>
    %18 = tpu.matmul %16, %17, %cst_14 {dimension_numbers = #tpu.dot_dimension_numbers<[1], [0], [0], [1], [0, 0, 1, 1], [], []>} : vector<8x64xbf16>, vector<64x32xbf16>, vector<8x32xf32> -> vector<8x32xf32>
    %c0_15 = arith.constant 0 : index
    %c0_16 = arith.constant 0 : index
    %19 = vector.load %arg7[%c0_15, %c0_16] : memref<1x32xf32, #tpu.memory_space<vmem>>, vector<1x32xf32>
    %20 = vector.broadcast %19 : vector<1x32xf32> to vector<8x32xf32>
    %21 = arith.addf %18, %20 : vector<8x32xf32>
    %cst_17 = arith.constant 0.000000e+00 : f32
    %22 = vector.broadcast %cst_17 : f32 to vector<8x32xf32>
    %23 = arith.maximumf %21, %22 : vector<8x32xf32>
    %24 = arith.truncf %23 : vector<8x32xf32> to vector<8x32xbf16>
    %c0_18 = arith.constant 0 : index
    %c0_19 = arith.constant 0 : index
    %25 = vector.load %arg8[%c0_18, %c0_19] : memref<32x16xbf16, #tpu.memory_space<vmem>>, vector<32x16xbf16>
    %cst_20 = arith.constant dense<0.000000e+00> : vector<8x16xf32>
    %26 = tpu.matmul %24, %25, %cst_20 {dimension_numbers = #tpu.dot_dimension_numbers<[1], [0], [0], [1], [0, 0, 1, 1], [], []>} : vector<8x32xbf16>, vector<32x16xbf16>, vector<8x16xf32> -> vector<8x16xf32>
    %c0_21 = arith.constant 0 : index
    %c0_22 = arith.constant 0 : index
    %27 = vector.load %arg9[%c0_21, %c0_22] : memref<1x16xf32, #tpu.memory_space<vmem>>, vector<1x16xf32>
    %28 = vector.broadcast %27 : vector<1x16xf32> to vector<8x16xf32>
    %29 = arith.addf %26, %28 : vector<8x16xf32>
    %cst_23 = arith.constant 0.000000e+00 : f32
    %30 = vector.broadcast %cst_23 : f32 to vector<8x16xf32>
    %31 = arith.maximumf %29, %30 : vector<8x16xf32>
    %32 = arith.truncf %31 : vector<8x16xf32> to vector<8x16xbf16>
    %c0_24 = arith.constant 0 : index
    %c0_25 = arith.constant 0 : index
    %33 = vector.load %arg10[%c0_24, %c0_25] : memref<16x128xbf16, #tpu.memory_space<vmem>>, vector<16x128xbf16>
    %cst_26 = arith.constant dense<0.000000e+00> : vector<8x128xf32>
    %34 = tpu.matmul %32, %33, %cst_26 {dimension_numbers = #tpu.dot_dimension_numbers<[1], [0], [0], [1], [0, 0, 1, 1], [], []>} : vector<8x16xbf16>, vector<16x128xbf16>, vector<8x128xf32> -> vector<8x128xf32>
    %c0_27 = arith.constant 0 : index
    %c0_28 = arith.constant 0 : index
    %35 = vector.load %arg11[%c0_27, %c0_28] : memref<1x128xf32, #tpu.memory_space<vmem>>, vector<1x128xf32>
    %36 = vector.broadcast %35 : vector<1x128xf32> to vector<8x128xf32>
    %37 = arith.addf %34, %36 : vector<8x128xf32>
    %cst_29 = arith.constant dense<0xFF800000> : vector<8xf32>
    %38 = vector.multi_reduction <maximumf>, %37, %cst_29 [1] : vector<8x128xf32> to vector<8xf32>
    %39 = vector.shape_cast %38 : vector<8xf32> to vector<8x1xf32>
    %40 = vector.broadcast %39 : vector<8x1xf32> to vector<8x128xf32>
    %41 = arith.subf %37, %40 : vector<8x128xf32>
    %42 = math.exp %41 : vector<8x128xf32>
    %cst_30 = arith.constant dense<0.000000e+00> : vector<8xf32>
    %43 = vector.multi_reduction <add>, %42, %cst_30 [1] : vector<8x128xf32> to vector<8xf32>
    %44 = vector.shape_cast %43 : vector<8xf32> to vector<8x1xf32>
    %45 = math.log %44 : vector<8x1xf32>
    %46 = vector.broadcast %45 : vector<8x1xf32> to vector<8x128xf32>
    %47 = arith.subf %41, %46 : vector<8x128xf32>
    %c0_31 = arith.constant 0 : index
    %c0_32 = arith.constant 0 : index
    %48 = vector.load %arg12[%c0_31, %c0_32] : memref<8x128xf32, #tpu.memory_space<vmem>>, vector<8x128xf32>
    tpu.vector_store %arg12[%c0_31, %c0_32], %47 {strides = array<i32>} : memref<8x128xf32, #tpu.memory_space<vmem>>, vector<8x128xf32>,
    return
  }
  func.func @transform_0(%arg0: i32) -> (i32, i32) {
    %c0_i32 = arith.constant 0 : i32
    %c0_i32_0 = arith.constant 0 : i32
    return %arg0, %c0_i32 : i32, i32
  }
  func.func @transform_1(%arg0: i32) -> (i32, i32) {
    %c0_i32 = arith.constant 0 : i32
    %c0_i32_0 = arith.constant 0 : i32
    %c0_i32_1 = arith.constant 0 : i32
    return %c0_i32, %c0_i32_0 : i32, i32
  }
  func.func @transform_2(%arg0: i32) -> (i32, i32) {
    %c0_i32 = arith.constant 0 : i32
    %c0_i32_0 = arith.constant 0 : i32
    %c0_i32_1 = arith.constant 0 : i32
    return %c0_i32, %c0_i32_0 : i32, i32
  }
  func.func @transform_3(%arg0: i32) -> (i32, i32) {
    %c0_i32 = arith.constant 0 : i32
    %c0_i32_0 = arith.constant 0 : i32
    %c0_i32_1 = arith.constant 0 : i32
    return %c0_i32, %c0_i32_0 : i32, i32
  }
  func.func @transform_4(%arg0: i32) -> (i32, i32) {
    %c0_i32 = arith.constant 0 : i32
    %c0_i32_0 = arith.constant 0 : i32
    %c0_i32_1 = arith.constant 0 : i32
    return %c0_i32, %c0_i32_0 : i32, i32
  }
  func.func @transform_5(%arg0: i32) -> (i32, i32) {
    %c0_i32 = arith.constant 0 : i32
    %c0_i32_0 = arith.constant 0 : i32
    %c0_i32_1 = arith.constant 0 : i32
    return %c0_i32, %c0_i32_0 : i32, i32
  }
  func.func @transform_6(%arg0: i32) -> (i32, i32) {
    %c0_i32 = arith.constant 0 : i32
    %c0_i32_0 = arith.constant 0 : i32
    %c0_i32_1 = arith.constant 0 : i32
    return %c0_i32, %c0_i32_0 : i32, i32
  }
  func.func @transform_7(%arg0: i32) -> (i32, i32) {
    %c0_i32 = arith.constant 0 : i32
    %c0_i32_0 = arith.constant 0 : i32
    %c0_i32_1 = arith.constant 0 : i32
    return %c0_i32, %c0_i32_0 : i32, i32
  }
  func.func @transform_8(%arg0: i32) -> (i32, i32) {
    %c0_i32 = arith.constant 0 : i32
    %c0_i32_0 = arith.constant 0 : i32
    %c0_i32_1 = arith.constant 0 : i32
    return %c0_i32, %c0_i32_0 : i32, i32
  }
  func.func @transform_9(%arg0: i32) -> (i32, i32) {
    %c0_i32 = arith.constant 0 : i32
    %c0_i32_0 = arith.constant 0 : i32
    %c0_i32_1 = arith.constant 0 : i32
    return %c0_i32, %c0_i32_0 : i32, i32
  }
  func.func @transform_10(%arg0: i32) -> (i32, i32) {
    %c0_i32 = arith.constant 0 : i32
    %c0_i32_0 = arith.constant 0 : i32
    %c0_i32_1 = arith.constant 0 : i32
    return %c0_i32, %c0_i32_0 : i32, i32
  }
  func.func @transform_11(%arg0: i32) -> (i32, i32) {
    %c0_i32 = arith.constant 0 : i32
    %c0_i32_0 = arith.constant 0 : i32
    return %arg0, %c0_i32 : i32, i32
  }
}

</mosaic_0001>

<llo_original>
// kernel: model_bow_forward.1
$region0: #{model_bow_forward.1}
  #allocation0 [shape = 'u32[]', space=smem, size = 0x4, offset = 0x4, fixed_abs, tag = 'smem constant byte address 0x4 - core index']
  #allocation1 [shape = 'u32[144,128]{1,0:T(1,128)}', space=vmem, size = 0x12000, scoped, tag = 'internal scratch']
  %s0 = inlined_call_operand.vmem [shape: bf16[8,128], index: 0, kind: input, shape index: {}]
  %s1 = inlined_call_operand.vmem [shape: bf16[128,256], index: 1, kind: input, shape index: {}]
  %s2 = inlined_call_operand.vmem [shape: f32[1,256], index: 2, kind: input, shape index: {}]
  %s3 = inlined_call_operand.vmem [shape: bf16[256,64], index: 3, kind: input, shape index: {}]
  %s4 = inlined_call_operand.vmem [shape: f32[1,64], index: 4, kind: input, shape index: {}]
  %s5 = inlined_call_operand.vmem [shape: bf16[64,32], index: 5, kind: input, shape index: {}]
  %s6 = inlined_call_operand.vmem [shape: f32[1,32], index: 6, kind: input, shape index: {}]
  %s7 = inlined_call_operand.vmem [shape: bf16[32,16], index: 7, kind: input, shape index: {}]
  %s8 = inlined_call_operand.vmem [shape: f32[1,16], index: 8, kind: input, shape index: {}]
  %s9 = inlined_call_operand.vmem [shape: bf16[16,128], index: 9, kind: input, shape index: {}]
  %s10 = inlined_call_operand.vmem [shape: f32[1,128], index: 10, kind: input, shape index: {}]
  %s11 = inlined_call_operand.hbm [shape: f32[8,128], index: 11, kind: output, shape index: {}]
  %s12 = sld [smem:[#allocation0]]
  $region54: #{model_bow_forward.1} parent=0
    _
  %s14 = ssub.s32 1, %s12
  %s15 = scalar_select 0, %s14, %s12
  $region1: #{model_bow_forward.1} parent=0
    #allocation2 [shape = 'u8[4096]{0}', space=vmem, size = 0x1000, scoped, tag = 'output window, operand 0, single buffered']
    #allocation3 [shape = 's32[1]{0}', space=sflag, size = 0x4, scoped, tag = 'scoped memory for model_bow_forward.1']
    %16 = vsyncpa [#allocation3], 0
    // Predicated region
    $region2: #{model_bow_forward.1} parent=1 // pred_check
      _
    $region3: #{model_bow_forward.1} parent=1 // pred_check_branch
      %18 = sbr.rel (0) target = $region5
    $region4: #{model_bow_forward.1} parent=1 // pred_region
      _
    $region5: #{model_bow_forward.1} parent=1 // pred_fallthru
      _
    // Predicated region
    $region6: #{model_bow_forward.1} parent=1 // pred_check
      _
    $region7: #{model_bow_forward.1} parent=1 // pred_check_branch
      %20 = sbr.rel (0) target = $region9
    $region8: #{model_bow_forward.1} parent=1 // pred_region
      _
    $region9: #{model_bow_forward.1} parent=1 // pred_fallthru
      _
    // Predicated region
    $region10: #{model_bow_forward.1} parent=1 // pred_check
      _
    $region11: #{model_bow_forward.1} parent=1 // pred_check_branch
      %22 = sbr.rel (0) target = $region13
    $region12: #{model_bow_forward.1} parent=1 // pred_region
      _
    $region13: #{model_bow_forward.1} parent=1 // pred_fallthru
      _
    // Predicated region
    $region14: #{model_bow_forward.1} parent=1 // pred_check
      _
    $region15: #{model_bow_forward.1} parent=1 // pred_check_branch
      %24 = sbr.rel (0) target = $region17
    $region16: #{model_bow_forward.1} parent=1 // pred_region
      _
    $region17: #{model_bow_forward.1} parent=1 // pred_fallthru
      _
    // Predicated region
    $region18: #{model_bow_forward.1} parent=1 // pred_check
      _
    $region19: #{model_bow_forward.1} parent=1 // pred_check_branch
      %26 = sbr.rel (0) target = $region21
    $region20: #{model_bow_forward.1} parent=1 // pred_region
      _
    $region21: #{model_bow_forward.1} parent=1 // pred_fallthru
      _
    // Predicated region
    $region22: #{model_bow_forward.1} parent=1 // pred_check
      _
    $region23: #{model_bow_forward.1} parent=1 // pred_check_branch
      %28 = sbr.rel (0) target = $region25
    $region24: #{model_bow_forward.1} parent=1 // pred_region
      _
    $region25: #{model_bow_forward.1} parent=1 // pred_fallthru
      _
    // Predicated region
    $region26: #{model_bow_forward.1} parent=1 // pred_check
      _
    $region27: #{model_bow_forward.1} parent=1 // pred_check_branch
      %30 = sbr.rel (0) target = $region29
    $region28: #{model_bow_forward.1} parent=1 // pred_region
      _
    $region29: #{model_bow_forward.1} parent=1 // pred_fallthru
      _
    // Predicated region
    $region30: #{model_bow_forward.1} parent=1 // pred_check
      _
    $region31: #{model_bow_forward.1} parent=1 // pred_check_branch
      %32 = sbr.rel (0) target = $region33
    $region32: #{model_bow_forward.1} parent=1 // pred_region
      _
    $region33: #{model_bow_forward.1} parent=1 // pred_fallthru
      _
    // Predicated region
    $region34: #{model_bow_forward.1} parent=1 // pred_check
      _
    $region35: #{model_bow_forward.1} parent=1 // pred_check_branch
      %34 = sbr.rel (0) target = $region37
    $region36: #{model_bow_forward.1} parent=1 // pred_region
      _
    $region37: #{model_bow_forward.1} parent=1 // pred_fallthru
      _
    // Predicated region
    $region38: #{model_bow_forward.1} parent=1 // pred_check
      _
    $region39: #{model_bow_forward.1} parent=1 // pred_check_branch
      %36 = sbr.rel (0) target = $region41
    $region40: #{model_bow_forward.1} parent=1 // pred_region
      _
    $region41: #{model_bow_forward.1} parent=1 // pred_fallthru
      _
    // Predicated region
    $region42: #{model_bow_forward.1} parent=1 // pred_check
      _
    $region43: #{model_bow_forward.1} parent=1 // pred_check_branch
      %38 = sbr.rel (0) target = $region45
    $region44: #{model_bow_forward.1} parent=1 // pred_region
      _
    $region45: #{model_bow_forward.1} parent=1 // pred_fallthru
      _
    %v40 = vld [vmem:[%s0] sm:$0xf]
    %v41 = vld [vmem:[%s1] sm:$0xff]
    %v42 = vld [vmem:[%s1 + $0x8] sm:$0xff]
    %v43 = vld [vmem:[%s1 + $0x10] sm:$0xff]
    %v44 = vld [vmem:[%s1 + $0x18] sm:$0xff]
    %v45 = vld [vmem:[%s1 + $0x20] sm:$0xff]
    %v46 = vld [vmem:[%s1 + $0x28] sm:$0xff]
    %v47 = vld [vmem:[%s1 + $0x30] sm:$0xff]
    %v48 = vld [vmem:[%s1 + $0x38] sm:$0xff]
    %v49 = vld [vmem:[%s1 + $0x40] sm:$0xff]
    %v50 = vld [vmem:[%s1 + $0x48] sm:$0xff]
    %v51 = vld [vmem:[%s1 + $0x50] sm:$0xff]
    %v52 = vld [vmem:[%s1 + $0x58] sm:$0xff]
    %v53 = vld [vmem:[%s1 + $0x60] sm:$0xff]
    %v54 = vld [vmem:[%s1 + $0x68] sm:$0xff]
    %v55 = vld [vmem:[%s1 + $0x70] sm:$0xff]
    %v56 = vld [vmem:[%s1 + $0x78] sm:$0xff]
    %v57 = vld [vmem:[%s2] sm:$0x3]
    %v59 = vlaneseq
    %v60 = vshrl.u32 %v59, 7
    %v61 = vsub.s32 0, %v60
    %v62 = vrot.slane %v57, %v61
    %v63 = vlaneseq
    %v64 = vshrl.u32 %v63, 7
    %v65 = vsub.s32 1, %v64
    %v66 = vrot.slane %v57, %v65
    %v85 = vunpack.c.l.b16 %v41
    %v86 = vunpack.c.h.b16 %v41
    %v87 = vunpack.c.l.b16 %v42
    %v88 = vunpack.c.h.b16 %v42
    %v89 = vunpack.c.l.b16 %v43
    %v90 = vunpack.c.h.b16 %v43
    %v91 = vunpack.c.l.b16 %v44
    %v92 = vunpack.c.h.b16 %v44
    %v93 = vunpack.c.l.b16 %v45
    %v94 = vunpack.c.h.b16 %v45
    %v95 = vunpack.c.l.b16 %v46
    %v96 = vunpack.c.h.b16 %v46
    %v97 = vunpack.c.l.b16 %v47
    %v98 = vunpack.c.h.b16 %v47
    %v99 = vunpack.c.l.b16 %v48
    %v100 = vunpack.c.h.b16 %v48
    %v101 = vunpack.c.l.b16 %v49
    %v102 = vunpack.c.h.b16 %v49
    %v103 = vunpack.c.l.b16 %v50
    %v104 = vunpack.c.h.b16 %v50
    %v105 = vunpack.c.l.b16 %v51
    %v106 = vunpack.c.h.b16 %v51
    %v107 = vunpack.c.l.b16 %v52
    %v108 = vunpack.c.h.b16 %v52
    %v109 = vunpack.c.l.b16 %v53
    %v110 = vunpack.c.h.b16 %v53
    %v111 = vunpack.c.l.b16 %v54
    %v112 = vunpack.c.h.b16 %v54
    %v113 = vunpack.c.l.b16 %v55
    %v114 = vunpack.c.h.b16 %v55
    %v115 = vunpack.c.l.b16 %v56
    %v116 = vunpack.c.h.b16 %v56
    %v117 = vpack.c.b16 %v87, %v85
    %v118 = vpack.c.b16 %v88, %v86
    %v119 = vpack.c.b16 %v91, %v89
    %v120 = vpack.c.b16 %v92, %v90
    %v121 = vpack.c.b16 %v95, %v93
    %v122 = vpack.c.b16 %v96, %v94
    %v123 = vpack.c.b16 %v99, %v97
    %v124 = vpack.c.b16 %v100, %v98
    %v125 = vpack.c.b16 %v103, %v101
    %v126 = vpack.c.b16 %v104, %v102
    %v127 = vpack.c.b16 %v107, %v105
    %v128 = vpack.c.b16 %v108, %v106
    %v129 = vpack.c.b16 %v111, %v109
    %v130 = vpack.c.b16 %v112, %v110
    %v131 = vpack.c.b16 %v115, %v113
    %v132 = vpack.c.b16 %v116, %v114
    %149 = vmatprep.subr.bf16.mxu0 %v132
    %150 = vmatpush1.bf16.msra.mxu0 %v131
    %151 = vmatprep.subr.bf16.mxu0 %v130
    %152 = vmatpush1.bf16.msra.mxu0 %v129
    %153 = vmatprep.subr.bf16.mxu0 %v128
    %154 = vmatpush1.bf16.msra.mxu0 %v127
    %155 = vmatprep.subr.bf16.mxu0 %v126
    %156 = vmatpush1.bf16.msra.mxu0 %v125
    %157 = vmatprep.subr.bf16.mxu0 %v124
    %158 = vmatpush1.bf16.msra.mxu0 %v123
    %159 = vmatprep.subr.bf16.mxu0 %v122
    %160 = vmatpush1.bf16.msra.mxu0 %v121
    %161 = vmatprep.subr.bf16.mxu0 %v120
    %162 = vmatpush1.bf16.msra.mxu0 %v119
    %163 = vmatprep.subr.bf16.mxu0 %v118
    %164 = vmatpush1.bf16.msra.mxu0 %v117
    %165 = vmatprep.subr.bf16.mxu0 0
    %166 = vmatpush2.bf16.msra.mxu0 0
    %167 = vmatprep.subr.bf16.mxu0 0
    %168 = vmatpush2.bf16.msra.mxu0 0
    %169 = vmatprep.subr.bf16.mxu0 0
    %170 = vmatpush2.bf16.msra.mxu0 0
    %171 = vmatprep.subr.bf16.mxu0 0
    %172 = vmatpush2.bf16.msra.mxu0 0
    %173 = vmatprep.subr.bf16.mxu0 0
    %174 = vmatpush2.bf16.msra.mxu0 0
    %175 = vmatprep.subr.bf16.mxu0 0
    %176 = vmatpush2.bf16.msra.mxu0 0
    %177 = vmatprep.subr.bf16.mxu0 0
    %178 = vmatpush2.bf16.msra.mxu0 0
    %179 = vmatprep.subr.bf16.mxu0 0
    %180 = vmatpush2.bf16.msra.mxu0 0
    %181 = vmatprep.mubr.bf16.mxu0 0
    %182 = vmatmul.mubr.bf16.gmra.mxu0 %v40
    %v183 = vpop.f32.mrf.mxu0
    %v184 = vadd.f32 %v62, %v183
    %v185 = vpop.f32.mrf.mxu0
    %v186 = vadd.f32 %v66, %v185
    %v187 = vpop.f32.mrf.mxu0
    %v188 = vpop.f32.mrf.mxu0
    %189 = vdwg.mxu0
    %v190 = vmax.f32 %v184, 0.0
    %v191 = vmax.f32 %v186, 0.0
    %v192 = vpack.c.bf16 %v190, %v190
    %v193 = vpack.c.bf16 %v191, %v191
    %v194 = vld [vmem:[%s3] sm:$0xf]
    %v195 = vld [vmem:[%s3 + $0x4] sm:$0xf]
    %v196 = vld [vmem:[%s3 + $0x8] sm:$0xf]
    %v197 = vld [vmem:[%s3 + $0xc] sm:$0xf]
    %v198 = vld [vmem:[%s3 + $0x10] sm:$0xf]
    %v199 = vld [vmem:[%s3 + $0x14] sm:$0xf]
    %v200 = vld [vmem:[%s3 + $0x18] sm:$0xf]
    %v201 = vld [vmem:[%s3 + $0x1c] sm:$0xf]
    %v202 = vld [vmem:[%s3 + $0x20] sm:$0xf]
    %v203 = vld [vmem:[%s3 + $0x24] sm:$0xf]
    %v204 = vld [vmem:[%s3 + $0x28] sm:$0xf]
    %v205 = vld [vmem:[%s3 + $0x2c] sm:$0xf]
    %v206 = vld [vmem:[%s3 + $0x30] sm:$0xf]
    %v207 = vld [vmem:[%s3 + $0x34] sm:$0xf]
    %v208 = vld [vmem:[%s3 + $0x38] sm:$0xf]
    %v209 = vld [vmem:[%s3 + $0x3c] sm:$0xf]
    %v210 = vld [vmem:[%s3 + $0x40] sm:$0xf]
    %v211 = vld [vmem:[%s3 + $0x44] sm:$0xf]
    %v212 = vld [vmem:[%s3 + $0x48] sm:$0xf]
    %v213 = vld [vmem:[%s3 + $0x4c] sm:$0xf]
    %v214 = vld [vmem:[%s3 + $0x50] sm:$0xf]
    %v215 = vld [vmem:[%s3 + $0x54] sm:$0xf]
    %v216 = vld [vmem:[%s3 + $0x58] sm:$0xf]
    %v217 = vld [vmem:[%s3 + $0x5c] sm:$0xf]
    %v218 = vld [vmem:[%s3 + $0x60] sm:$0xf]
    %v219 = vld [vmem:[%s3 + $0x64] sm:$0xf]
    %v220 = vld [vmem:[%s3 + $0x68] sm:$0xf]
    %v221 = vld [vmem:[%s3 + $0x6c] sm:$0xf]
    %v222 = vld [vmem:[%s3 + $0x70] sm:$0xf]
    %v223 = vld [vmem:[%s3 + $0x74] sm:$0xf]
    %v224 = vld [vmem:[%s3 + $0x78] sm:$0xf]
    %v225 = vld [vmem:[%s3 + $0x7c] sm:$0xf]
    %v226 = vld [vmem:[%s4] sm:$0x1]
    %v228 = vlaneseq
    %v229 = vshrl.u32 %v228, 7
    %v230 = vsub.s32 0, %v229
    %v231 = vrot.slane %v226, %v230
    %v265 = vunpack.c.l.b16 %v194
    %v266 = vunpack.c.l.b16 %v195
    %v267 = vunpack.c.l.b16 %v196
    %v268 = vunpack.c.l.b16 %v197
    %v269 = vunpack.c.l.b16 %v198
    %v270 = vunpack.c.l.b16 %v199
    %v271 = vunpack.c.l.b16 %v200
    %v272 = vunpack.c.l.b16 %v201
    %v273 = vunpack.c.l.b16 %v202
    %v274 = vunpack.c.l.b16 %v203
    %v275 = vunpack.c.l.b16 %v204
    %v276 = vunpack.c.l.b16 %v205
    %v277 = vunpack.c.l.b16 %v206
    %v278 = vunpack.c.l.b16 %v207
    %v279 = vunpack.c.l.b16 %v208
    %v280 = vunpack.c.l.b16 %v209
    %v281 = vunpack.c.l.b16 %v210
    %v282 = vunpack.c.l.b16 %v211
    %v283 = vunpack.c.l.b16 %v212
    %v284 = vunpack.c.l.b16 %v213
    %v285 = vunpack.c.l.b16 %v214
    %v286 = vunpack.c.l.b16 %v215
    %v287 = vunpack.c.l.b16 %v216
    %v288 = vunpack.c.l.b16 %v217
    %v289 = vunpack.c.l.b16 %v218
    %v290 = vunpack.c.l.b16 %v219
    %v291 = vunpack.c.l.b16 %v220
    %v292 = vunpack.c.l.b16 %v221
    %v293 = vunpack.c.l.b16 %v222
    %v294 = vunpack.c.l.b16 %v223
    %v295 = vunpack.c.l.b16 %v224
    %v296 = vunpack.c.l.b16 %v225
    %v297 = vpack.c.b16 %v266, %v265
    %v298 = vpack.c.b16 %v268, %v267
    %v299 = vpack.c.b16 %v270, %v269
    %v300 = vpack.c.b16 %v272, %v271
    %v301 = vpack.c.b16 %v274, %v273
    %v302 = vpack.c.b16 %v276, %v275
    %v303 = vpack.c.b16 %v278, %v277
    %v304 = vpack.c.b16 %v280, %v279
    %v305 = vpack.c.b16 %v282, %v281
    %v306 = vpack.c.b16 %v284, %v283
    %v307 = vpack.c.b16 %v286, %v285
    %v308 = vpack.c.b16 %v288, %v287
    %v309 = vpack.c.b16 %v290, %v289
    %v310 = vpack.c.b16 %v292, %v291
    %v311 = vpack.c.b16 %v294, %v293
    %v312 = vpack.c.b16 %v296, %v295
    %329 = vmatprep.subr.bf16.mxu0 0
    %330 = vmatpush1.bf16.msra.mxu0 %v304
    %331 = vmatprep.subr.bf16.mxu0 0
    %332 = vmatpush1.bf16.msra.mxu0 %v303
    %333 = vmatprep.subr.bf16.mxu0 0
    %334 = vmatpush1.bf16.msra.mxu0 %v302
    %335 = vmatprep.subr.bf16.mxu0 0
    %336 = vmatpush1.bf16.msra.mxu0 %v301
    %337 = vmatprep.subr.bf16.mxu0 0
    %338 = vmatpush1.bf16.msra.mxu0 %v300
    %339 = vmatprep.subr.bf16.mxu0 0
    %340 = vmatpush1.bf16.msra.mxu0 %v299
    %341 = vmatprep.subr.bf16.mxu0 0
    %342 = vmatpush1.bf16.msra.mxu0 %v298
    %343 = vmatprep.subr.bf16.mxu0 0
    %344 = vmatpush1.bf16.msra.mxu0 %v297
    %345 = vmatprep.subr.bf16.mxu0 0
    %346 = vmatpush2.bf16.msra.mxu0 %v312
    %347 = vmatprep.subr.bf16.mxu0 0
    %348 = vmatpush2.bf16.msra.mxu0 %v311
    %349 = vmatprep.subr.bf16.mxu0 0
    %350 = vmatpush2.bf16.msra.mxu0 %v310
    %351 = vmatprep.subr.bf16.mxu0 0
    %352 = vmatpush2.bf16.msra.mxu0 %v309
    %353 = vmatprep.subr.bf16.mxu0 0
    %354 = vmatpush2.bf16.msra.mxu0 %v308
    %355 = vmatprep.subr.bf16.mxu0 0
    %356 = vmatpush2.bf16.msra.mxu0 %v307
    %357 = vmatprep.subr.bf16.mxu0 0
    %358 = vmatpush2.bf16.msra.mxu0 %v306
    %359 = vmatprep.subr.bf16.mxu0 0
    %360 = vmatpush2.bf16.msra.mxu0 %v305
    %361 = vmatprep.mubr.bf16.mxu0 %v193
    %362 = vmatmul.mubr.bf16.gmra.mxu0 %v192
    %v363 = vpop.f32.mrf.mxu0
    %v364 = vadd.f32 %v231, %v363
    %v365 = vpop.f32.mrf.mxu0
    %v366 = vpop.f32.mrf.mxu0
    %v367 = vpop.f32.mrf.mxu0
    %368 = vdwg.mxu0
    %v369 = vmax.f32 %v364, 0.0
    %v370 = vpack.c.bf16 %v369, %v369
    %v371 = vld [vmem:[%s5] sm:$0xf]
    %v372 = vld [vmem:[%s5 + $0x4] sm:$0xf]
    %v373 = vld [vmem:[%s5 + $0x8] sm:$0xf]
    %v374 = vld [vmem:[%s5 + $0xc] sm:$0xf]
    %v375 = vld [vmem:[%s5 + $0x10] sm:$0xf]
    %v376 = vld [vmem:[%s5 + $0x14] sm:$0xf]
    %v377 = vld [vmem:[%s5 + $0x18] sm:$0xf]
    %v378 = vld [vmem:[%s5 + $0x1c] sm:$0xf]
    %v379 = vld [vmem:[%s6] sm:$0x1]
    %v381 = vlaneseq
    %v382 = vshrl.u32 %v381, 7
    %v383 = vsub.s32 0, %v382
    %v384 = vrot.slane %v379, %v383
    %v394 = vunpack.c.l.b16 %v371
    %v395 = vunpack.c.l.b16 %v372
    %v396 = vunpack.c.l.b16 %v373
    %v397 = vunpack.c.l.b16 %v374
    %v398 = vunpack.c.l.b16 %v375
    %v399 = vunpack.c.l.b16 %v376
    %v400 = vunpack.c.l.b16 %v377
    %v401 = vunpack.c.l.b16 %v378
    %v402 = vpack.c.b16 %v395, %v394
    %v403 = vpack.c.b16 %v397, %v396
    %v404 = vpack.c.b16 %v399, %v398
    %v405 = vpack.c.b16 %v401, %v400
    %vm410 = vcmask 523264
    %v412 = vsel %vm410, %v370, 0
    %414 = vmatprep.subr.bf16.mxu0 0
    %415 = vmatpush1.bf16.msra.mxu0 0
    %416 = vmatprep.subr.bf16.mxu0 0
    %417 = vmatpush1.bf16.msra.mxu0 0
    %418 = vmatprep.subr.bf16.mxu0 0
    %419 = vmatpush1.bf16.msra.mxu0 0
    %420 = vmatprep.subr.bf16.mxu0 0
    %421 = vmatpush1.bf16.msra.mxu0 0
    %422 = vmatprep.subr.bf16.mxu0 0
    %423 = vmatpush1.bf16.msra.mxu0 %v405
    %424 = vmatprep.subr.bf16.mxu0 0
    %425 = vmatpush1.bf16.msra.mxu0 %v404
    %426 = vmatprep.subr.bf16.mxu0 0
    %427 = vmatpush1.bf16.msra.mxu0 %v403
    %428 = vmatprep.subr.bf16.mxu0 0
    %429 = vmatpush1.bf16.msra.mxu0 %v402
    %430 = vmatprep.subr.bf16.mxu0 0
    %431 = vmatpush2.bf16.msra.mxu0 0
    %432 = vmatprep.subr.bf16.mxu0 0
    %433 = vmatpush2.bf16.msra.mxu0 0
    %434 = vmatprep.subr.bf16.mxu0 0
    %435 = vmatpush2.bf16.msra.mxu0 0
    %436 = vmatprep.subr.bf16.mxu0 0
    %437 = vmatpush2.bf16.msra.mxu0 0
    %438 = vmatprep.subr.bf16.mxu0 0
    %439 = vmatpush2.bf16.msra.mxu0 0
    %440 = vmatprep.subr.bf16.mxu0 0
    %441 = vmatpush2.bf16.msra.mxu0 0
    %442 = vmatprep.subr.bf16.mxu0 0
    %443 = vmatpush2.bf16.msra.mxu0 0
    %444 = vmatprep.subr.bf16.mxu0 0
    %445 = vmatpush2.bf16.msra.mxu0 0
    %446 = vmatprep.mubr.bf16.mxu0 0
    %447 = vmatmul.mubr.bf16.gmra.mxu0 %v412
    %v448 = vpop.f32.mrf.mxu0
    %v449 = vadd.f32 %v384, %v448
    %v450 = vpop.f32.mrf.mxu0
    %v451 = vpop.f32.mrf.mxu0
    %v452 = vpop.f32.mrf.mxu0
    %453 = vdwg.mxu0
    %v454 = vmax.f32 %v449, 0.0
    %v455 = vpack.c.bf16 %v454, %v454
    %v456 = vld [vmem:[%s7] sm:$0xf]
    %v457 = vld [vmem:[%s7 + $0x4] sm:$0xf]
    %v458 = vld [vmem:[%s7 + $0x8] sm:$0xf]
    %v459 = vld [vmem:[%s7 + $0xc] sm:$0xf]
    %v460 = vld [vmem:[%s8] sm:$0x1]
    %v462 = vlaneseq
    %v463 = vshrl.u32 %v462, 7
    %v464 = vsub.s32 0, %v463
    %v465 = vrot.slane %v460, %v464
    %v471 = vunpack.c.l.b16 %v456
    %v472 = vunpack.c.l.b16 %v457
    %v473 = vunpack.c.l.b16 %v458
    %v474 = vunpack.c.l.b16 %v459
    %v475 = vpack.c.b16 %v472, %v471
    %v476 = vpack.c.b16 %v474, %v473
    %vm479 = vcmask 261120
    %v481 = vsel %vm479, %v455, 0
    %483 = vmatprep.subr.bf16.mxu0 0
    %484 = vmatpush1.bf16.msra.mxu0 0
    %485 = vmatprep.subr.bf16.mxu0 0
    %486 = vmatpush1.bf16.msra.mxu0 0
    %487 = vmatprep.subr.bf16.mxu0 0
    %488 = vmatpush1.bf16.msra.mxu0 0
    %489 = vmatprep.subr.bf16.mxu0 0
    %490 = vmatpush1.bf16.msra.mxu0 0
    %491 = vmatprep.subr.bf16.mxu0 0
    %492 = vmatpush1.bf16.msra.mxu0 0
    %493 = vmatprep.subr.bf16.mxu0 0
    %494 = vmatpush1.bf16.msra.mxu0 0
    %495 = vmatprep.subr.bf16.mxu0 0
    %496 = vmatpush1.bf16.msra.mxu0 %v476
    %497 = vmatprep.subr.bf16.mxu0 0
    %498 = vmatpush1.bf16.msra.mxu0 %v475
    %499 = vmatprep.subr.bf16.mxu0 0
    %500 = vmatpush2.bf16.msra.mxu0 0
    %501 = vmatprep.subr.bf16.mxu0 0
    %502 = vmatpush2.bf16.msra.mxu0 0
    %503 = vmatprep.subr.bf16.mxu0 0
    %504 = vmatpush2.bf16.msra.mxu0 0
    %505 = vmatprep.subr.bf16.mxu0 0
    %506 = vmatpush2.bf16.msra.mxu0 0
    %507 = vmatprep.subr.bf16.mxu0 0
    %508 = vmatpush2.bf16.msra.mxu0 0
    %509 = vmatprep.subr.bf16.mxu0 0
    %510 = vmatpush2.bf16.msra.mxu0 0
    %511 = vmatprep.subr.bf16.mxu0 0
    %512 = vmatpush2.bf16.msra.mxu0 0
    %513 = vmatprep.subr.bf16.mxu0 0
    %514 = vmatpush2.bf16.msra.mxu0 0
    %515 = vmatprep.mubr.bf16.mxu0 0
    %516 = vmatmul.mubr.bf16.gmra.mxu0 %v481
    %v517 = vpop.f32.mrf.mxu0
    %v518 = vadd.f32 %v465, %v517
    %v519 = vpop.f32.mrf.mxu0
    %v520 = vpop.f32.mrf.mxu0
    %v521 = vpop.f32.mrf.mxu0
    %522 = vdwg.mxu0
    %v523 = vmax.f32 %v518, 0.0
    %v524 = vpack.c.bf16 %v523, %v523
    %v525 = vld [vmem:[%s9] sm:$0xf]
    %v526 = vld [vmem:[%s9 + $0x4] sm:$0xf]
    %v527 = vld [vmem:[%s10] sm:$0x1]
    %v529 = vlaneseq
    %v530 = vshrl.u32 %v529, 7
    %v531 = vsub.s32 0, %v530
    %v532 = vrot.slane %v527, %v531
    %v536 = vunpack.c.l.b16 %v525
    %v537 = vunpack.c.l.b16 %v526
    %v538 = vpack.c.b16 %v537, %v536
    %vm540 = vcmask 130048
    %v542 = vsel %vm540, %v524, 0
    %544 = vmatprep.subr.bf16.mxu0 0
    %545 = vmatpush1.bf16.msra.mxu0 0
    %546 = vmatprep.subr.bf16.mxu0 0
    %547 = vmatpush1.bf16.msra.mxu0 0
    %548 = vmatprep.subr.bf16.mxu0 0
    %549 = vmatpush1.bf16.msra.mxu0 0
    %550 = vmatprep.subr.bf16.mxu0 0
    %551 = vmatpush1.bf16.msra.mxu0 0
    %552 = vmatprep.subr.bf16.mxu0 0
    %553 = vmatpush1.bf16.msra.mxu0 0
    %554 = vmatprep.subr.bf16.mxu0 0
    %555 = vmatpush1.bf16.msra.mxu0 0
    %556 = vmatprep.subr.bf16.mxu0 0
    %557 = vmatpush1.bf16.msra.mxu0 0
    %558 = vmatprep.subr.bf16.mxu0 0
    %559 = vmatpush1.bf16.msra.mxu0 %v538
    %560 = vmatprep.subr.bf16.mxu0 0
    %561 = vmatpush2.bf16.msra.mxu0 0
    %562 = vmatprep.subr.bf16.mxu0 0
    %563 = vmatpush2.bf16.msra.mxu0 0
    %564 = vmatprep.subr.bf16.mxu0 0
    %565 = vmatpush2.bf16.msra.mxu0 0
    %566 = vmatprep.subr.bf16.mxu0 0
    %567 = vmatpush2.bf16.msra.mxu0 0
    %568 = vmatprep.subr.bf16.mxu0 0
    %569 = vmatpush2.bf16.msra.mxu0 0
    %570 = vmatprep.subr.bf16.mxu0 0
    %571 = vmatpush2.bf16.msra.mxu0 0
    %572 = vmatprep.subr.bf16.mxu0 0
    %573 = vmatpush2.bf16.msra.mxu0 0
    %574 = vmatprep.subr.bf16.mxu0 0
    %575 = vmatpush2.bf16.msra.mxu0 0
    %576 = vmatprep.mubr.bf16.mxu0 0
    %577 = vmatmul.mubr.bf16.gmra.mxu0 %v542
    %v578 = vpop.f32.mrf.mxu0
    %v579 = vadd.f32 %v532, %v578
    %v580 = vpop.f32.mrf.mxu0
    %v581 = vpop.f32.mrf.mxu0
    %v582 = vpop.f32.mrf.mxu0
    %583 = vdwg.mxu0
    %584 = vmax.xlane.f32.xlu0 %v579
    %v585 = vpop.xlane.xlu0 %584
    %v586 = vsub.f32 %v579, %v585
    %v587 = vmul.f32 %v586, 1.442695
    %v588 = vpow.pop %v587
    %589 = vadd.xlane.f32.xlu0 %v588
    %v590 = vpop.xlane.xlu0 %589
    %v591 = vlog2.pop %v590
    %v592 = vmul.f32 %v591, 0.6931472
    %v593 = vsub.f32 %v586, %v592
    %594 = vst [vmem:[#allocation2] sm:$0xff] %v593
    // Predicated region
    $region46: #{model_bow_forward.1} parent=1 // pred_check
      _
    $region47: #{model_bow_forward.1} parent=1 // pred_check_branch
      %596 = sbr.rel (0) target = $region49
    $region48: #{model_bow_forward.1} parent=1 // pred_region
      %s598 = ssub.s32 128, 128
      %599 = vsyncadd [#allocation3], %s598
      %s601 = sshll.u32 [#allocation2], 4
      %s602 = int_to_ptr.vmem [resolvable:$true] %s601
      %604 = dma.vmem_to_hbm [thread:$0]  %s602, 128, %s11, [#allocation3]
    $region49: #{model_bow_forward.1} parent=1 // pred_fallthru
      _
    // Predicated region
    $region50: #{model_bow_forward.1} parent=1 // pred_check
      _
    $region51: #{model_bow_forward.1} parent=1 // pred_check_branch
      %606 = sbr.rel (0) target = $region53
    $region52: #{model_bow_forward.1} parent=1 // pred_region
      %607 = dma.done [#allocation3], 128
    $region53: #{model_bow_forward.1} parent=1 // pred_fallthru
      _
    %608 = vsyncpa [#allocation3], 1

</llo_original>
